<compile_context>
chip_gen: v6e
topology: v6e:2x2x1
jax: 0.10.0
libtpu: 0.0.40
codegen_flags: <defaults>
</compile_context>

<pallas_src>
import functools
import math

import jax
import jax.numpy as jnp
from jax.experimental import pallas as pl
from jax.experimental.pallas import tpu as pltpu


def _round_up(x, m):
    return (x + m - 1) // m * m


def _proj_kernel(x_ref, w_ref, b_ref, o_ref):
    """One batch tile: o = x @ W + b, f32 accumulation on the MXU."""
    h = x_ref[...]
    if h.dtype != w_ref.dtype:
        h = h.astype(w_ref.dtype)  # e.g. f32 activations with bf16 weights
    acc = jnp.dot(h, w_ref[...], preferred_element_type=jnp.float32)
    o_ref[...] = (acc + b_ref[...].astype(jnp.float32)).astype(o_ref.dtype)


@functools.partial(jax.jit, static_argnames=("block_b",))
def language_encoder_head(last_hidden_state, w, b, *, block_b=1024):
    """CLS pooling + projection of LanguageEncoder (eval mode).

    Args:
      last_hidden_state: (B, S, D) frozen-backbone output.
      w: (D, output_dim) projection weight.  NOTE: torch nn.Linear stores
         (out_features, in_features) -- transpose when importing real weights.
      b: (1, output_dim) projection bias.
      block_b: batch tile (rows per grid step); must be a multiple of 8.
    """
    assert block_b % 8 == 0
    B, S, D = last_hidden_state.shape
    O = w.shape[1]
    assert w.shape[0] == D and b.shape == (1, O)

    # Lane-dense (128-aligned) output width: pad weight/bias columns, slice result.
    O_pad = _round_up(O, 128)
    if O_pad != O:
        w = jnp.pad(w, ((0, 0), (0, O_pad - O)))
        b = jnp.pad(b, ((0, 0), (0, O_pad - O)))

    if D % 128 == 0:
        # Free reshape: row i of (B, S*D) starts with that example's CLS
        # features, so a (TB, D) block at column-block 0 fetches exactly the
        # CLS rows -- no (B, D) intermediate is ever written to HBM.
        x = last_hidden_state.reshape(B, S * D)
    else:
        # Fallback keeps the 128-lane block constraint (block last dim == full
        # array dim) at the cost of materializing the small CLS slice.
        x = last_hidden_state[:, 0, :]

    TB = min(block_b, B)  # either the full batch or a multiple of 8
    grid = (pl.cdiv(B, TB),)  # ragged final block handled by Pallas masking

    in_specs = [
        pl.BlockSpec((TB, D), lambda i: (i, 0)),      # CLS tile, pipelined
        pl.BlockSpec((D, O_pad), lambda i: (0, 0)),   # weight, VMEM-resident
        pl.BlockSpec((1, O_pad), lambda i: (0, 0)),   # bias, VMEM-resident
    ]
    out_specs = pl.BlockSpec((TB, O_pad), lambda i: (i, 0))

    cost = pl.CostEstimate(
        flops=2 * B * D * O_pad,
        transcendentals=0,
        bytes_accessed=(B * D * last_hidden_state.dtype.itemsize  # CLS reads
                        + D * O_pad * w.dtype.itemsize            # weights
                        + O_pad * b.dtype.itemsize                # bias
                        + B * O_pad * 4),                         # f32 output
    )

    out = pl.pallas_call(
        _proj_kernel,
        out_shape=jax.ShapeDtypeStruct((B, O_pad), jnp.float32),
        grid=grid,
        in_specs=in_specs,
        out_specs=out_specs,
        compiler_params=pltpu.CompilerParams(
            dimension_semantics=("parallel",)),  # megacore / v7x dual-TC
        cost_estimate=cost,
    )(x, w, b)

    return out[:, :O] if O_pad != O else out


def init_params(key, backbone_dim, output_dim, weight_dtype=jnp.float32):
    """nn.Linear-style init; weight stored as (in, out) == torch_weight.T."""
    kw, kb = jax.random.split(key)
    lim = 1.0 / math.sqrt(backbone_dim)
    return {
        "w": jax.random.uniform(kw, (backbone_dim, output_dim), jnp.float32,
                                -lim, lim).astype(weight_dtype),
        "b": jax.random.uniform(kb, (1, output_dim), jnp.float32, -lim, lim),
    }


def reference_head(last_hidden_state, w, b):
    """Pure-JAX reference: CLS pooling + Linear."""
    cls = last_hidden_state[:, 0, :]
    if cls.dtype != w.dtype:
        cls = cls.astype(w.dtype)
    return jnp.dot(cls, w, preferred_element_type=jnp.float32) + b.astype(jnp.float32)


if __name__ == "__main__":
    B, S = 2, 8   # small demo batch / seq_len
    D = 768       # bert-base-uncased hidden_size
    OUT = 512     # LanguageEncoder default output_dim

    key = jax.random.PRNGKey(0)
    k_ids, k_h, k_p = jax.random.split(key, 3)

    # Interface tensors of the original module (consumed only by the backbone).
    input_ids = jax.random.randint(k_ids, (B, S), 0, 30522, dtype=jnp.int32)
    attention_mask = jnp.ones((B, S), dtype=jnp.int32)
    # TODO(synk): the frozen pretrained BERT backbone (AutoModel.from_pretrained)
    # has no self-contained Pallas equivalent; its last_hidden_state is
    # simulated here and taken as the kernel input.
    last_hidden_state = jax.random.normal(k_h, (B, S, D), jnp.float32)

    params = init_params(k_p, D, OUT, weight_dtype=jnp.float32)

    # f32-weight path
    out = language_encoder_head(last_hidden_state, params["w"], params["b"])
    out = jax.block_until_ready(out)
    ref = reference_head(last_hidden_state, params["w"], params["b"])
    assert out.shape == (B, OUT)
    assert jnp.allclose(out, ref, atol=2e-2, rtol=2e-2)

    # bf16-weight path (halved weight HBM traffic, bf16 MXU, f32 accumulation)
    w16 = params["w"].astype(jnp.bfloat16)
    out16 = language_encoder_head(last_hidden_state, w16, params["b"])
    out16 = jax.block_until_ready(out16)
    ref16 = reference_head(last_hidden_state, w16, params["b"])
    assert out16.shape == (B, OUT)
    assert jnp.allclose(out16, ref16, atol=2e-2, rtol=2e-2)

    print("KERNEL_OK")
</pallas_src>

<mosaic_0001>
module attributes {stable_mosaic.version = 11 : i64} {
  func.func @_proj_kernel(%arg0: i32, %arg1: memref<2x768xf32, #tpu.memory_space<vmem>>, %arg2: memref<768x512xf32, #tpu.memory_space<vmem>>, %arg3: memref<1x512xf32, #tpu.memory_space<vmem>>, %arg4: memref<2x512xf32, #tpu.memory_space<vmem>>) attributes {dimension_semantics = [#tpu.dimension_semantics<parallel>], iteration_bounds = array<i64: 1>, scalar_prefetch = 0 : i64, scratch_operands = 0 : i64, tpu.core_type = #tpu.core_type<tc>, window_params = [{transform_indices = @transform_0, window_bounds = array<i64: 2, 768>}, {pipeline_mode = #tpu.pipeline_mode<synchronous>, transform_indices = @transform_1, window_bounds = array<i64: 768, 512>}, {pipeline_mode = #tpu.pipeline_mode<synchronous>, transform_indices = @transform_2, window_bounds = array<i64: 1, 512>}, {transform_indices = @transform_3, window_bounds = array<i64: 2, 512>}]} {
    %c0 = arith.constant 0 : index
    %c0_0 = arith.constant 0 : index
    %0 = vector.load %arg1[%c0, %c0_0] : memref<2x768xf32, #tpu.memory_space<vmem>>, vector<2x768xf32>
    %c0_1 = arith.constant 0 : index
    %c0_2 = arith.constant 0 : index
    %1 = vector.load %arg2[%c0_1, %c0_2] : memref<768x512xf32, #tpu.memory_space<vmem>>, vector<768x512xf32>
    %cst = arith.constant dense<0.000000e+00> : vector<2x512xf32>
    %2 = tpu.matmul %0, %1, %cst {dimension_numbers = #tpu.dot_dimension_numbers<[1], [0], [0], [1], [0, 0, 1, 1], [], []>} : vector<2x768xf32>, vector<768x512xf32>, vector<2x512xf32> -> vector<2x512xf32>
    %c0_3 = arith.constant 0 : index
    %c0_4 = arith.constant 0 : index
    %3 = vector.load %arg3[%c0_3, %c0_4] : memref<1x512xf32, #tpu.memory_space<vmem>>, vector<1x512xf32>
    %4 = vector.broadcast %3 : vector<1x512xf32> to vector<2x512xf32>
    %5 = arith.addf %2, %4 : vector<2x512xf32>
    %c0_5 = arith.constant 0 : index
    %c0_6 = arith.constant 0 : index
    %6 = vector.load %arg4[%c0_5, %c0_6] : memref<2x512xf32, #tpu.memory_space<vmem>>, vector<2x512xf32>
    tpu.vector_store %arg4[%c0_5, %c0_6], %5 {strides = array<i32>} : memref<2x512xf32, #tpu.memory_space<vmem>>, vector<2x512xf32>,
    return
  }
  func.func @transform_0(%arg0: i32) -> (i32, i32) {
    %c0_i32 = arith.constant 0 : i32
    %c0_i32_0 = arith.constant 0 : i32
    return %arg0, %c0_i32 : i32, i32
  }
  func.func @transform_1(%arg0: i32) -> (i32, i32) {
    %c0_i32 = arith.constant 0 : i32
    %c0_i32_0 = arith.constant 0 : i32
    %c0_i32_1 = arith.constant 0 : i32
    return %c0_i32, %c0_i32_0 : i32, i32
  }
  func.func @transform_2(%arg0: i32) -> (i32, i32) {
    %c0_i32 = arith.constant 0 : i32
    %c0_i32_0 = arith.constant 0 : i32
    %c0_i32_1 = arith.constant 0 : i32
    return %c0_i32, %c0_i32_0 : i32, i32
  }
  func.func @transform_3(%arg0: i32) -> (i32, i32) {
    %c0_i32 = arith.constant 0 : i32
    %c0_i32_0 = arith.constant 0 : i32
    return %arg0, %c0_i32 : i32, i32
  }
}

</mosaic_0001>

<llo_original>
// kernel: language_encoder_head.1
$region0: #{language_encoder_head.1}
  #allocation0 [shape = 'u32[]', space=smem, size = 0x4, offset = 0x4, fixed_abs, tag = 'smem constant byte address 0x4 - core index']
  #allocation1 [shape = 'u32[144,128]{1,0:T(1,128)}', space=vmem, size = 0x12000, scoped, tag = 'internal scratch']
  %s0 = inlined_call_operand.vmem [shape: f32[2,6144], index: 0, kind: input, shape index: {}]
  %s1 = inlined_call_operand.hbm [shape: f32[768,512], index: 1, kind: input, shape index: {}]
  %s2 = inlined_call_operand.hbm [shape: f32[1,512], index: 2, kind: input, shape index: {}]
  %s3 = inlined_call_operand.hbm [shape: f32[2,512], index: 3, kind: output, shape index: {}]
  %s4 = sld [smem:[#allocation0]]
  $region30: #{language_encoder_head.1} parent=0
    _
  %s6 = ssub.s32 1, %s4
  %s7 = scalar_select 0, %s6, %s4
  $region1: #{language_encoder_head.1} parent=0
    #allocation2 [shape = 'u8[1572864]{0}', space=vmem, size = 0x180000, scoped, tag = 'input window, operand 1, single buffered']
    #allocation3 [shape = 's32[1]{0}', space=sflag, size = 0x4, scoped, tag = 'scoped memory for language_encoder_head.1']
    #allocation4 [shape = 's32[1]{0}', space=sflag, size = 0x4, scoped, tag = 'scoped memory for language_encoder_head.1']
    #allocation5 [shape = 'u8[2048]{0}', space=vmem, size = 0x800, scoped, tag = 'input window, operand 2, single buffered']
    #allocation6 [shape = 's32[1]{0}', space=sflag, size = 0x4, scoped, tag = 'scoped memory for language_encoder_head.1']
    #allocation7 [shape = 'u8[4096]{0}', space=vmem, size = 0x1000, scoped, tag = 'output window, operand 0, single buffered']
    %8 = vsyncpa [#allocation3], 0
    %9 = vsyncpa [#allocation6], 0
    %10 = vsyncpa [#allocation4], 0
    // Predicated region
    $region2: #{language_encoder_head.1} parent=1 // pred_check
      _
    $region3: #{language_encoder_head.1} parent=1 // pred_check_branch
      %12 = sbr.rel (0) target = $region5
    $region4: #{language_encoder_head.1} parent=1 // pred_region
      _
    $region5: #{language_encoder_head.1} parent=1 // pred_fallthru
      _
    // Predicated region
    $region6: #{language_encoder_head.1} parent=1 // pred_check
      _
    $region7: #{language_encoder_head.1} parent=1 // pred_check_branch
      %14 = sbr.rel (0) target = $region9
    $region8: #{language_encoder_head.1} parent=1 // pred_region
      %s16 = ssub.s32 49152, 49152
      %17 = vsyncadd [#allocation3], %s16
      %s18 = sshll.u32 [#allocation2], 4
      %s19 = int_to_ptr.vmem [resolvable:$true] %s18
      %24 = dma.hbm_to_vmem [thread:$0]  %s1, 49152, %s19, [#allocation3], 512, 512, 32
    $region9: #{language_encoder_head.1} parent=1 // pred_fallthru
      _
    // Predicated region
    $region10: #{language_encoder_head.1} parent=1 // pred_check
      _
    $region11: #{language_encoder_head.1} parent=1 // pred_check_branch
      %26 = sbr.rel (0) target = $region13
    $region12: #{language_encoder_head.1} parent=1 // pred_region
      %s28 = ssub.s32 64, 64
      %29 = vsyncadd [#allocation6], %s28
      %s31 = sshll.u32 [#allocation5], 4
      %s32 = int_to_ptr.vmem [resolvable:$true] %s31
      %34 = dma.hbm_to_vmem [thread:$0]  %s2, 64, %s32, [#allocation6]
    $region13: #{language_encoder_head.1} parent=1 // pred_fallthru
      _
    // Predicated region
    $region14: #{language_encoder_head.1} parent=1 // pred_check
      _
    $region15: #{language_encoder_head.1} parent=1 // pred_check_branch
      %36 = sbr.rel (0) target = $region17
    $region16: #{language_encoder_head.1} parent=1 // pred_region
      %37 = dma.done [#allocation3], 49152
    $region17: #{language_encoder_head.1} parent=1 // pred_fallthru
      _
    // Predicated region
    $region18: #{language_encoder_head.1} parent=1 // pred_check
      _
    $region19: #{language_encoder_head.1} parent=1 // pred_check_branch
      %39 = sbr.rel (0) target = $region21
    $region20: #{language_encoder_head.1} parent=1 // pred_region
      %40 = dma.done [#allocation6], 64
    $region21: #{language_encoder_head.1} parent=1 // pred_fallthru
      _
    %v41 = vld [vmem:[%s0] sm:$0xff]
    %v42 = vld [vmem:[%s0 + $0x8] sm:$0xf]
    %v43 = vld [vmem:[#allocation2] sm:$0xff]
    %v44 = vld [vmem:[#allocation2 + $0x8] sm:$0xff]
    %v45 = vld [vmem:[#allocation2 + $0x10] sm:$0xff]
    %v46 = vld [vmem:[#allocation2 + $0x18] sm:$0xff]
    %v47 = vld [vmem:[#allocation2 + $0x20] sm:$0xff]
    %v48 = vld [vmem:[#allocation2 + $0x28] sm:$0xff]
    %v49 = vld [vmem:[#allocation2 + $0x30] sm:$0xff]
    %v50 = vld [vmem:[#allocation2 + $0x38] sm:$0xff]
    %v51 = vld [vmem:[#allocation2 + $0x40] sm:$0xff]
    %v52 = vld [vmem:[#allocation2 + $0x48] sm:$0xff]
    %v53 = vld [vmem:[#allocation2 + $0x50] sm:$0xff]
    %v54 = vld [vmem:[#allocation2 + $0x58] sm:$0xff]
    %v55 = vld [vmem:[#allocation2 + $0x60] sm:$0xff]
    %v56 = vld [vmem:[#allocation2 + $0x68] sm:$0xff]
    %v57 = vld [vmem:[#allocation2 + $0x70] sm:$0xff]
    %v58 = vld [vmem:[#allocation2 + $0x78] sm:$0xff]
    %v59 = vld [vmem:[#allocation2 + $0x80] sm:$0xff]
    %v60 = vld [vmem:[#allocation2 + $0x88] sm:$0xff]
    %v61 = vld [vmem:[#allocation2 + $0x90] sm:$0xff]
    %v62 = vld [vmem:[#allocation2 + $0x98] sm:$0xff]
    %v63 = vld [vmem:[#allocation2 + $0xa0] sm:$0xff]
    %v64 = vld [vmem:[#allocation2 + $0xa8] sm:$0xff]
    %v65 = vld [vmem:[#allocation2 + $0xb0] sm:$0xff]
    %v66 = vld [vmem:[#allocation2 + $0xb8] sm:$0xff]
    %v67 = vld [vmem:[#allocation2 + $0xc0] sm:$0xff]
    %v68 = vld [vmem:[#allocation2 + $0xc8] sm:$0xff]
    %v69 = vld [vmem:[#allocation2 + $0xd0] sm:$0xff]
    %v70 = vld [vmem:[#allocation2 + $0xd8] sm:$0xff]
    %v71 = vld [vmem:[#allocation2 + $0xe0] sm:$0xff]
    %v72 = vld [vmem:[#allocation2 + $0xe8] sm:$0xff]
    %v73 = vld [vmem:[#allocation2 + $0xf0] sm:$0xff]
    %v74 = vld [vmem:[#allocation2 + $0xf8] sm:$0xff]
    %v75 = vld [vmem:[#allocation2 + $0x100] sm:$0xff]
    %v76 = vld [vmem:[#allocation2 + $0x108] sm:$0xff]
    %v77 = vld [vmem:[#allocation2 + $0x110] sm:$0xff]
    %v78 = vld [vmem:[#allocation2 + $0x118] sm:$0xff]
    %v79 = vld [vmem:[#allocation2 + $0x120] sm:$0xff]
    %v80 = vld [vmem:[#allocation2 + $0x128] sm:$0xff]
    %v81 = vld [vmem:[#allocation2 + $0x130] sm:$0xff]
    %v82 = vld [vmem:[#allocation2 + $0x138] sm:$0xff]
    %v83 = vld [vmem:[#allocation2 + $0x140] sm:$0xff]
    %v84 = vld [vmem:[#allocation2 + $0x148] sm:$0xff]
    %v85 = vld [vmem:[#allocation2 + $0x150] sm:$0xff]
    %v86 = vld [vmem:[#allocation2 + $0x158] sm:$0xff]
    %v87 = vld [vmem:[#allocation2 + $0x160] sm:$0xff]
    %v88 = vld [vmem:[#allocation2 + $0x168] sm:$0xff]
    %v89 = vld [vmem:[#allocation2 + $0x170] sm:$0xff]
    %v90 = vld [vmem:[#allocation2 + $0x178] sm:$0xff]
    %v91 = vld [vmem:[#allocation2 + $0x180] sm:$0xff]
    %v92 = vld [vmem:[#allocation2 + $0x188] sm:$0xff]
    %v93 = vld [vmem:[#allocation2 + $0x190] sm:$0xff]
    %v94 = vld [vmem:[#allocation2 + $0x198] sm:$0xff]
    %v95 = vld [vmem:[#allocation2 + $0x1a0] sm:$0xff]
    %v96 = vld [vmem:[#allocation2 + $0x1a8] sm:$0xff]
    %v97 = vld [vmem:[#allocation2 + $0x1b0] sm:$0xff]
    %v98 = vld [vmem:[#allocation2 + $0x1b8] sm:$0xff]
    %v99 = vld [vmem:[#allocation2 + $0x1c0] sm:$0xff]
    %v100 = vld [vmem:[#allocation2 + $0x1c8] sm:$0xff]
    %v101 = vld [vmem:[#allocation2 + $0x1d0] sm:$0xff]
    %v102 = vld [vmem:[#allocation2 + $0x1d8] sm:$0xff]
    %v103 = vld [vmem:[#allocation2 + $0x1e0] sm:$0xff]
    %v104 = vld [vmem:[#allocation2 + $0x1e8] sm:$0xff]
    %v105 = vld [vmem:[#allocation2 + $0x1f0] sm:$0xff]
    %v106 = vld [vmem:[#allocation2 + $0x1f8] sm:$0xff]
    %v107 = vld [vmem:[#allocation2 + $0x200] sm:$0xff]
    %v108 = vld [vmem:[#allocation2 + $0x208] sm:$0xff]
    %v109 = vld [vmem:[#allocation2 + $0x210] sm:$0xff]
    %v110 = vld [vmem:[#allocation2 + $0x218] sm:$0xff]
    %v111 = vld [vmem:[#allocation2 + $0x220] sm:$0xff]
    %v112 = vld [vmem:[#allocation2 + $0x228] sm:$0xff]
    %v113 = vld [vmem:[#allocation2 + $0x230] sm:$0xff]
    %v114 = vld [vmem:[#allocation2 + $0x238] sm:$0xff]
    %v115 = vld [vmem:[#allocation2 + $0x240] sm:$0xff]
    %v116 = vld [vmem:[#allocation2 + $0x248] sm:$0xff]
    %v117 = vld [vmem:[#allocation2 + $0x250] sm:$0xff]
    %v118 = vld [vmem:[#allocation2 + $0x258] sm:$0xff]
    %v119 = vld [vmem:[#allocation2 + $0x260] sm:$0xff]
    %v120 = vld [vmem:[#allocation2 + $0x268] sm:$0xff]
    %v121 = vld [vmem:[#allocation2 + $0x270] sm:$0xff]
    %v122 = vld [vmem:[#allocation2 + $0x278] sm:$0xff]
    %v123 = vld [vmem:[#allocation2 + $0x280] sm:$0xff]
    %v124 = vld [vmem:[#allocation2 + $0x288] sm:$0xff]
    %v125 = vld [vmem:[#allocation2 + $0x290] sm:$0xff]
    %v126 = vld [vmem:[#allocation2 + $0x298] sm:$0xff]
    %v127 = vld [vmem:[#allocation2 + $0x2a0] sm:$0xff]
    %v128 = vld [vmem:[#allocation2 + $0x2a8] sm:$0xff]
    %v129 = vld [vmem:[#allocation2 + $0x2b0] sm:$0xff]
    %v130 = vld [vmem:[#allocation2 + $0x2b8] sm:$0xff]
    %v131 = vld [vmem:[#allocation2 + $0x2c0] sm:$0xff]
    %v132 = vld [vmem:[#allocation2 + $0x2c8] sm:$0xff]
    %v133 = vld [vmem:[#allocation2 + $0x2d0] sm:$0xff]
    %v134 = vld [vmem:[#allocation2 + $0x2d8] sm:$0xff]
    %v135 = vld [vmem:[#allocation2 + $0x2e0] sm:$0xff]
    %v136 = vld [vmem:[#allocation2 + $0x2e8] sm:$0xff]
    %v137 = vld [vmem:[#allocation2 + $0x2f0] sm:$0xff]
    %v138 = vld [vmem:[#allocation2 + $0x2f8] sm:$0xff]
    %v139 = vld [vmem:[#allocation2 + $0x300] sm:$0xff]
    %v140 = vld [vmem:[#allocation2 + $0x308] sm:$0xff]
    %v141 = vld [vmem:[#allocation2 + $0x310] sm:$0xff]
    %v142 = vld [vmem:[#allocation2 + $0x318] sm:$0xff]
    %v143 = vld [vmem:[#allocation2 + $0x320] sm:$0xff]
    %v144 = vld [vmem:[#allocation2 + $0x328] sm:$0xff]
    %v145 = vld [vmem:[#allocation2 + $0x330] sm:$0xff]
    %v146 = vld [vmem:[#allocation2 + $0x338] sm:$0xff]
    %v147 = vld [vmem:[#allocation2 + $0x340] sm:$0xff]
    %v148 = vld [vmem:[#allocation2 + $0x348] sm:$0xff]
    %v149 = vld [vmem:[#allocation2 + $0x350] sm:$0xff]
    %v150 = vld [vmem:[#allocation2 + $0x358] sm:$0xff]
    %v151 = vld [vmem:[#allocation2 + $0x360] sm:$0xff]
    %v152 = vld [vmem:[#allocation2 + $0x368] sm:$0xff]
    %v153 = vld [vmem:[#allocation2 + $0x370] sm:$0xff]
    %v154 = vld [vmem:[#allocation2 + $0x378] sm:$0xff]
    %v155 = vld [vmem:[#allocation2 + $0x380] sm:$0xff]
    %v156 = vld [vmem:[#allocation2 + $0x388] sm:$0xff]
    %v157 = vld [vmem:[#allocation2 + $0x390] sm:$0xff]
    %v158 = vld [vmem:[#allocation2 + $0x398] sm:$0xff]
    %v159 = vld [vmem:[#allocation2 + $0x3a0] sm:$0xff]
    %v160 = vld [vmem:[#allocation2 + $0x3a8] sm:$0xff]
    %v161 = vld [vmem:[#allocation2 + $0x3b0] sm:$0xff]
    %v162 = vld [vmem:[#allocation2 + $0x3b8] sm:$0xff]
    %v163 = vld [vmem:[#allocation2 + $0x3c0] sm:$0xff]
    %v164 = vld [vmem:[#allocation2 + $0x3c8] sm:$0xff]
    %v165 = vld [vmem:[#allocation2 + $0x3d0] sm:$0xff]
    %v166 = vld [vmem:[#allocation2 + $0x3d8] sm:$0xff]
    %v167 = vld [vmem:[#allocation2 + $0x3e0] sm:$0xff]
    %v168 = vld [vmem:[#allocation2 + $0x3e8] sm:$0xff]
    %v169 = vld [vmem:[#allocation2 + $0x3f0] sm:$0xff]
    %v170 = vld [vmem:[#allocation2 + $0x3f8] sm:$0xff]
    %v171 = vld [vmem:[#allocation2 + $0x400] sm:$0xff]
    %v172 = vld [vmem:[#allocation2 + $0x408] sm:$0xff]
    %v173 = vld [vmem:[#allocation2 + $0x410] sm:$0xff]
    %v174 = vld [vmem:[#allocation2 + $0x418] sm:$0xff]
    %v175 = vld [vmem:[#allocation2 + $0x420] sm:$0xff]
    %v176 = vld [vmem:[#allocation2 + $0x428] sm:$0xff]
    %v177 = vld [vmem:[#allocation2 + $0x430] sm:$0xff]
    %v178 = vld [vmem:[#allocation2 + $0x438] sm:$0xff]
    %v179 = vld [vmem:[#allocation2 + $0x440] sm:$0xff]
    %v180 = vld [vmem:[#allocation2 + $0x448] sm:$0xff]
    %v181 = vld [vmem:[#allocation2 + $0x450] sm:$0xff]
    %v182 = vld [vmem:[#allocation2 + $0x458] sm:$0xff]
    %v183 = vld [vmem:[#allocation2 + $0x460] sm:$0xff]
    %v184 = vld [vmem:[#allocation2 + $0x468] sm:$0xff]
    %v185 = vld [vmem:[#allocation2 + $0x470] sm:$0xff]
    %v186 = vld [vmem:[#allocation2 + $0x478] sm:$0xff]
    %v187 = vld [vmem:[#allocation2 + $0x480] sm:$0xff]
    %v188 = vld [vmem:[#allocation2 + $0x488] sm:$0xff]
    %v189 = vld [vmem:[#allocation2 + $0x490] sm:$0xff]
    %v190 = vld [vmem:[#allocation2 + $0x498] sm:$0xff]
    %v191 = vld [vmem:[#allocation2 + $0x4a0] sm:$0xff]
    %v192 = vld [vmem:[#allocation2 + $0x4a8] sm:$0xff]
    %v193 = vld [vmem:[#allocation2 + $0x4b0] sm:$0xff]
    %v194 = vld [vmem:[#allocation2 + $0x4b8] sm:$0xff]
    %v195 = vld [vmem:[#allocation2 + $0x4c0] sm:$0xff]
    %v196 = vld [vmem:[#allocation2 + $0x4c8] sm:$0xff]
    %v197 = vld [vmem:[#allocation2 + $0x4d0] sm:$0xff]
    %v198 = vld [vmem:[#allocation2 + $0x4d8] sm:$0xff]
    %v199 = vld [vmem:[#allocation2 + $0x4e0] sm:$0xff]
    %v200 = vld [vmem:[#allocation2 + $0x4e8] sm:$0xff]
    %v201 = vld [vmem:[#allocation2 + $0x4f0] sm:$0xff]
    %v202 = vld [vmem:[#allocation2 + $0x4f8] sm:$0xff]
    %v203 = vld [vmem:[#allocation2 + $0x500] sm:$0xff]
    %v204 = vld [vmem:[#allocation2 + $0x508] sm:$0xff]
    %v205 = vld [vmem:[#allocation2 + $0x510] sm:$0xff]
    %v206 = vld [vmem:[#allocation2 + $0x518] sm:$0xff]
    %v207 = vld [vmem:[#allocation2 + $0x520] sm:$0xff]
    %v208 = vld [vmem:[#allocation2 + $0x528] sm:$0xff]
    %v209 = vld [vmem:[#allocation2 + $0x530] sm:$0xff]
    %v210 = vld [vmem:[#allocation2 + $0x538] sm:$0xff]
    %v211 = vld [vmem:[#allocation2 + $0x540] sm:$0xff]
    %v212 = vld [vmem:[#allocation2 + $0x548] sm:$0xff]
    %v213 = vld [vmem:[#allocation2 + $0x550] sm:$0xff]
    %v214 = vld [vmem:[#allocation2 + $0x558] sm:$0xff]
    %v215 = vld [vmem:[#allocation2 + $0x560] sm:$0xff]
    %v216 = vld [vmem:[#allocation2 + $0x568] sm:$0xff]
    %v217 = vld [vmem:[#allocation2 + $0x570] sm:$0xff]
    %v218 = vld [vmem:[#allocation2 + $0x578] sm:$0xff]
    %v219 = vld [vmem:[#allocation2 + $0x580] sm:$0xff]
    %v220 = vld [vmem:[#allocation2 + $0x588] sm:$0xff]
    %v221 = vld [vmem:[#allocation2 + $0x590] sm:$0xff]
    %v222 = vld [vmem:[#allocation2 + $0x598] sm:$0xff]
    %v223 = vld [vmem:[#allocation2 + $0x5a0] sm:$0xff]
    %v224 = vld [vmem:[#allocation2 + $0x5a8] sm:$0xff]
    %v225 = vld [vmem:[#allocation2 + $0x5b0] sm:$0xff]
    %v226 = vld [vmem:[#allocation2 + $0x5b8] sm:$0xff]
    %v227 = vld [vmem:[#allocation2 + $0x5c0] sm:$0xff]
    %v228 = vld [vmem:[#allocation2 + $0x5c8] sm:$0xff]
    %v229 = vld [vmem:[#allocation2 + $0x5d0] sm:$0xff]
    %v230 = vld [vmem:[#allocation2 + $0x5d8] sm:$0xff]
    %v231 = vld [vmem:[#allocation2 + $0x5e0] sm:$0xff]
    %v232 = vld [vmem:[#allocation2 + $0x5e8] sm:$0xff]
    %v233 = vld [vmem:[#allocation2 + $0x5f0] sm:$0xff]
    %v234 = vld [vmem:[#allocation2 + $0x5f8] sm:$0xff]
    %v235 = vld [vmem:[#allocation2 + $0x600] sm:$0xff]
    %v236 = vld [vmem:[#allocation2 + $0x608] sm:$0xff]
    %v237 = vld [vmem:[#allocation2 + $0x610] sm:$0xff]
    %v238 = vld [vmem:[#allocation2 + $0x618] sm:$0xff]
    %v239 = vld [vmem:[#allocation2 + $0x620] sm:$0xff]
    %v240 = vld [vmem:[#allocation2 + $0x628] sm:$0xff]
    %v241 = vld [vmem:[#allocation2 + $0x630] sm:$0xff]
    %v242 = vld [vmem:[#allocation2 + $0x638] sm:$0xff]
    %v243 = vld [vmem:[#allocation2 + $0x640] sm:$0xff]
    %v244 = vld [vmem:[#allocation2 + $0x648] sm:$0xff]
    %v245 = vld [vmem:[#allocation2 + $0x650] sm:$0xff]
    %v246 = vld [vmem:[#allocation2 + $0x658] sm:$0xff]
    %v247 = vld [vmem:[#allocation2 + $0x660] sm:$0xff]
    %v248 = vld [vmem:[#allocation2 + $0x668] sm:$0xff]
    %v249 = vld [vmem:[#allocation2 + $0x670] sm:$0xff]
    %v250 = vld [vmem:[#allocation2 + $0x678] sm:$0xff]
    %v251 = vld [vmem:[#allocation2 + $0x680] sm:$0xff]
    %v252 = vld [vmem:[#allocation2 + $0x688] sm:$0xff]
    %v253 = vld [vmem:[#allocation2 + $0x690] sm:$0xff]
    %v254 = vld [vmem:[#allocation2 + $0x698] sm:$0xff]
    %v255 = vld [vmem:[#allocation2 + $0x6a0] sm:$0xff]
    %v256 = vld [vmem:[#allocation2 + $0x6a8] sm:$0xff]
    %v257 = vld [vmem:[#allocation2 + $0x6b0] sm:$0xff]
    %v258 = vld [vmem:[#allocation2 + $0x6b8] sm:$0xff]
    %v259 = vld [vmem:[#allocation2 + $0x6c0] sm:$0xff]
    %v260 = vld [vmem:[#allocation2 + $0x6c8] sm:$0xff]
    %v261 = vld [vmem:[#allocation2 + $0x6d0] sm:$0xff]
    %v262 = vld [vmem:[#allocation2 + $0x6d8] sm:$0xff]
    %v263 = vld [vmem:[#allocation2 + $0x6e0] sm:$0xff]
    %v264 = vld [vmem:[#allocation2 + $0x6e8] sm:$0xff]
    %v265 = vld [vmem:[#allocation2 + $0x6f0] sm:$0xff]
    %v266 = vld [vmem:[#allocation2 + $0x6f8] sm:$0xff]
    %v267 = vld [vmem:[#allocation2 + $0x700] sm:$0xff]
    %v268 = vld [vmem:[#allocation2 + $0x708] sm:$0xff]
    %v269 = vld [vmem:[#allocation2 + $0x710] sm:$0xff]
    %v270 = vld [vmem:[#allocation2 + $0x718] sm:$0xff]
    %v271 = vld [vmem:[#allocation2 + $0x720] sm:$0xff]
    %v272 = vld [vmem:[#allocation2 + $0x728] sm:$0xff]
    %v273 = vld [vmem:[#allocation2 + $0x730] sm:$0xff]
    %v274 = vld [vmem:[#allocation2 + $0x738] sm:$0xff]
    %v275 = vld [vmem:[#allocation2 + $0x740] sm:$0xff]
    %v276 = vld [vmem:[#allocation2 + $0x748] sm:$0xff]
    %v277 = vld [vmem:[#allocation2 + $0x750] sm:$0xff]
    %v278 = vld [vmem:[#allocation2 + $0x758] sm:$0xff]
    %v279 = vld [vmem:[#allocation2 + $0x760] sm:$0xff]
    %v280 = vld [vmem:[#allocation2 + $0x768] sm:$0xff]
    %v281 = vld [vmem:[#allocation2 + $0x770] sm:$0xff]
    %v282 = vld [vmem:[#allocation2 + $0x778] sm:$0xff]
    %v283 = vld [vmem:[#allocation2 + $0x780] sm:$0xff]
    %v284 = vld [vmem:[#allocation2 + $0x788] sm:$0xff]
    %v285 = vld [vmem:[#allocation2 + $0x790] sm:$0xff]
    %v286 = vld [vmem:[#allocation2 + $0x798] sm:$0xff]
    %v287 = vld [vmem:[#allocation2 + $0x7a0] sm:$0xff]
    %v288 = vld [vmem:[#allocation2 + $0x7a8] sm:$0xff]
    %v289 = vld [vmem:[#allocation2 + $0x7b0] sm:$0xff]
    %v290 = vld [vmem:[#allocation2 + $0x7b8] sm:$0xff]
    %v291 = vld [vmem:[#allocation2 + $0x7c0] sm:$0xff]
    %v292 = vld [vmem:[#allocation2 + $0x7c8] sm:$0xff]
    %v293 = vld [vmem:[#allocation2 + $0x7d0] sm:$0xff]
    %v294 = vld [vmem:[#allocation2 + $0x7d8] sm:$0xff]
    %v295 = vld [vmem:[#allocation2 + $0x7e0] sm:$0xff]
    %v296 = vld [vmem:[#allocation2 + $0x7e8] sm:$0xff]
    %v297 = vld [vmem:[#allocation2 + $0x7f0] sm:$0xff]
    %v298 = vld [vmem:[#allocation2 + $0x7f8] sm:$0xff]
    %v299 = vld [vmem:[#allocation2 + $0x800] sm:$0xff]
    %v300 = vld [vmem:[#allocation2 + $0x808] sm:$0xff]
    %v301 = vld [vmem:[#allocation2 + $0x810] sm:$0xff]
    %v302 = vld [vmem:[#allocation2 + $0x818] sm:$0xff]
    %v303 = vld [vmem:[#allocation2 + $0x820] sm:$0xff]
    %v304 = vld [vmem:[#allocation2 + $0x828] sm:$0xff]
    %v305 = vld [vmem:[#allocation2 + $0x830] sm:$0xff]
    %v306 = vld [vmem:[#allocation2 + $0x838] sm:$0xff]
    %v307 = vld [vmem:[#allocation2 + $0x840] sm:$0xff]
    %v308 = vld [vmem:[#allocation2 + $0x848] sm:$0xff]
    %v309 = vld [vmem:[#allocation2 + $0x850] sm:$0xff]
    %v310 = vld [vmem:[#allocation2 + $0x858] sm:$0xff]
    %v311 = vld [vmem:[#allocation2 + $0x860] sm:$0xff]
    %v312 = vld [vmem:[#allocation2 + $0x868] sm:$0xff]
    %v313 = vld [vmem:[#allocation2 + $0x870] sm:$0xff]
    %v314 = vld [vmem:[#allocation2 + $0x878] sm:$0xff]
    %v315 = vld [vmem:[#allocation2 + $0x880] sm:$0xff]
    %v316 = vld [vmem:[#allocation2 + $0x888] sm:$0xff]
    %v317 = vld [vmem:[#allocation2 + $0x890] sm:$0xff]
    %v318 = vld [vmem:[#allocation2 + $0x898] sm:$0xff]
    %v319 = vld [vmem:[#allocation2 + $0x8a0] sm:$0xff]
    %v320 = vld [vmem:[#allocation2 + $0x8a8] sm:$0xff]
    %v321 = vld [vmem:[#allocation2 + $0x8b0] sm:$0xff]
    %v322 = vld [vmem:[#allocation2 + $0x8b8] sm:$0xff]
    %v323 = vld [vmem:[#allocation2 + $0x8c0] sm:$0xff]
    %v324 = vld [vmem:[#allocation2 + $0x8c8] sm:$0xff]
    %v325 = vld [vmem:[#allocation2 + $0x8d0] sm:$0xff]
    %v326 = vld [vmem:[#allocation2 + $0x8d8] sm:$0xff]
    %v327 = vld [vmem:[#allocation2 + $0x8e0] sm:$0xff]
    %v328 = vld [vmem:[#allocation2 + $0x8e8] sm:$0xff]
    %v329 = vld [vmem:[#allocation2 + $0x8f0] sm:$0xff]
    %v330 = vld [vmem:[#allocation2 + $0x8f8] sm:$0xff]
    %v331 = vld [vmem:[#allocation2 + $0x900] sm:$0xff]
    %v332 = vld [vmem:[#allocation2 + $0x908] sm:$0xff]
    %v333 = vld [vmem:[#allocation2 + $0x910] sm:$0xff]
    %v334 = vld [vmem:[#allocation2 + $0x918] sm:$0xff]
    %v335 = vld [vmem:[#allocation2 + $0x920] sm:$0xff]
    %v336 = vld [vmem:[#allocation2 + $0x928] sm:$0xff]
    %v337 = vld [vmem:[#allocation2 + $0x930] sm:$0xff]
    %v338 = vld [vmem:[#allocation2 + $0x938] sm:$0xff]
    %v339 = vld [vmem:[#allocation2 + $0x940] sm:$0xff]
    %v340 = vld [vmem:[#allocation2 + $0x948] sm:$0xff]
    %v341 = vld [vmem:[#allocation2 + $0x950] sm:$0xff]
    %v342 = vld [vmem:[#allocation2 + $0x958] sm:$0xff]
    %v343 = vld [vmem:[#allocation2 + $0x960] sm:$0xff]
    %v344 = vld [vmem:[#allocation2 + $0x968] sm:$0xff]
    %v345 = vld [vmem:[#allocation2 + $0x970] sm:$0xff]
    %v346 = vld [vmem:[#allocation2 + $0x978] sm:$0xff]
    %v347 = vld [vmem:[#allocation2 + $0x980] sm:$0xff]
    %v348 = vld [vmem:[#allocation2 + $0x988] sm:$0xff]
    %v349 = vld [vmem:[#allocation2 + $0x990] sm:$0xff]
    %v350 = vld [vmem:[#allocation2 + $0x998] sm:$0xff]
    %v351 = vld [vmem:[#allocation2 + $0x9a0] sm:$0xff]
    %v352 = vld [vmem:[#allocation2 + $0x9a8] sm:$0xff]
    %v353 = vld [vmem:[#allocation2 + $0x9b0] sm:$0xff]
    %v354 = vld [vmem:[#allocation2 + $0x9b8] sm:$0xff]
    %v355 = vld [vmem:[#allocation2 + $0x9c0] sm:$0xff]
    %v356 = vld [vmem:[#allocation2 + $0x9c8] sm:$0xff]
    %v357 = vld [vmem:[#allocation2 + $0x9d0] sm:$0xff]
    %v358 = vld [vmem:[#allocation2 + $0x9d8] sm:$0xff]
    %v359 = vld [vmem:[#allocation2 + $0x9e0] sm:$0xff]
    %v360 = vld [vmem:[#allocation2 + $0x9e8] sm:$0xff]
    %v361 = vld [vmem:[#allocation2 + $0x9f0] sm:$0xff]
    %v362 = vld [vmem:[#allocation2 + $0x9f8] sm:$0xff]
    %v363 = vld [vmem:[#allocation2 + $0xa00] sm:$0xff]
    %v364 = vld [vmem:[#allocation2 + $0xa08] sm:$0xff]
    %v365 = vld [vmem:[#allocation2 + $0xa10] sm:$0xff]
    %v366 = vld [vmem:[#allocation2 + $0xa18] sm:$0xff]
    %v367 = vld [vmem:[#allocation2 + $0xa20] sm:$0xff]
    %v368 = vld [vmem:[#allocation2 + $0xa28] sm:$0xff]
    %v369 = vld [vmem:[#allocation2 + $0xa30] sm:$0xff]
    %v370 = vld [vmem:[#allocation2 + $0xa38] sm:$0xff]
    %v371 = vld [vmem:[#allocation2 + $0xa40] sm:$0xff]
    %v372 = vld [vmem:[#allocation2 + $0xa48] sm:$0xff]
    %v373 = vld [vmem:[#allocation2 + $0xa50] sm:$0xff]
    %v374 = vld [vmem:[#allocation2 + $0xa58] sm:$0xff]
    %v375 = vld [vmem:[#allocation2 + $0xa60] sm:$0xff]
    %v376 = vld [vmem:[#allocation2 + $0xa68] sm:$0xff]
    %v377 = vld [vmem:[#allocation2 + $0xa70] sm:$0xff]
    %v378 = vld [vmem:[#allocation2 + $0xa78] sm:$0xff]
    %v379 = vld [vmem:[#allocation2 + $0xa80] sm:$0xff]
    %v380 = vld [vmem:[#allocation2 + $0xa88] sm:$0xff]
    %v381 = vld [vmem:[#allocation2 + $0xa90] sm:$0xff]
    %v382 = vld [vmem:[#allocation2 + $0xa98] sm:$0xff]
    %v383 = vld [vmem:[#allocation2 + $0xaa0] sm:$0xff]
    %v384 = vld [vmem:[#allocation2 + $0xaa8] sm:$0xff]
    %v385 = vld [vmem:[#allocation2 + $0xab0] sm:$0xff]
    %v386 = vld [vmem:[#allocation2 + $0xab8] sm:$0xff]
    %v387 = vld [vmem:[#allocation2 + $0xac0] sm:$0xff]
    %v388 = vld [vmem:[#allocation2 + $0xac8] sm:$0xff]
    %v389 = vld [vmem:[#allocation2 + $0xad0] sm:$0xff]
    %v390 = vld [vmem:[#allocation2 + $0xad8] sm:$0xff]
    %v391 = vld [vmem:[#allocation2 + $0xae0] sm:$0xff]
    %v392 = vld [vmem:[#allocation2 + $0xae8] sm:$0xff]
    %v393 = vld [vmem:[#allocation2 + $0xaf0] sm:$0xff]
    %v394 = vld [vmem:[#allocation2 + $0xaf8] sm:$0xff]
    %v395 = vld [vmem:[#allocation2 + $0xb00] sm:$0xff]
    %v396 = vld [vmem:[#allocation2 + $0xb08] sm:$0xff]
    %v397 = vld [vmem:[#allocation2 + $0xb10] sm:$0xff]
    %v398 = vld [vmem:[#allocation2 + $0xb18] sm:$0xff]
    %v399 = vld [vmem:[#allocation2 + $0xb20] sm:$0xff]
    %v400 = vld [vmem:[#allocation2 + $0xb28] sm:$0xff]
    %v401 = vld [vmem:[#allocation2 + $0xb30] sm:$0xff]
    %v402 = vld [vmem:[#allocation2 + $0xb38] sm:$0xff]
    %v403 = vld [vmem:[#allocation2 + $0xb40] sm:$0xff]
    %v404 = vld [vmem:[#allocation2 + $0xb48] sm:$0xff]
    %v405 = vld [vmem:[#allocation2 + $0xb50] sm:$0xff]
    %v406 = vld [vmem:[#allocation2 + $0xb58] sm:$0xff]
    %v407 = vld [vmem:[#allocation2 + $0xb60] sm:$0xff]
    %v408 = vld [vmem:[#allocation2 + $0xb68] sm:$0xff]
    %v409 = vld [vmem:[#allocation2 + $0xb70] sm:$0xff]
    %v410 = vld [vmem:[#allocation2 + $0xb78] sm:$0xff]
    %v411 = vld [vmem:[#allocation2 + $0xb80] sm:$0xff]
    %v412 = vld [vmem:[#allocation2 + $0xb88] sm:$0xff]
    %v413 = vld [vmem:[#allocation2 + $0xb90] sm:$0xff]
    %v414 = vld [vmem:[#allocation2 + $0xb98] sm:$0xff]
    %v415 = vld [vmem:[#allocation2 + $0xba0] sm:$0xff]
    %v416 = vld [vmem:[#allocation2 + $0xba8] sm:$0xff]
    %v417 = vld [vmem:[#allocation2 + $0xbb0] sm:$0xff]
    %v418 = vld [vmem:[#allocation2 + $0xbb8] sm:$0xff]
    %v419 = vld [vmem:[#allocation2 + $0xbc0] sm:$0xff]
    %v420 = vld [vmem:[#allocation2 + $0xbc8] sm:$0xff]
    %v421 = vld [vmem:[#allocation2 + $0xbd0] sm:$0xff]
    %v422 = vld [vmem:[#allocation2 + $0xbd8] sm:$0xff]
    %v423 = vld [vmem:[#allocation2 + $0xbe0] sm:$0xff]
    %v424 = vld [vmem:[#allocation2 + $0xbe8] sm:$0xff]
    %v425 = vld [vmem:[#allocation2 + $0xbf0] sm:$0xff]
    %v426 = vld [vmem:[#allocation2 + $0xbf8] sm:$0xff]
    %v427 = vld [vmem:[#allocation5] sm:$0xf]
    %v429 = vlaneseq
    %v430 = vshrl.u32 %v429, 7
    %v431 = vsub.s32 0, %v430
    %v432 = vrot.slane %v427, %v431
    %v433 = vlaneseq
    %v434 = vshrl.u32 %v433, 7
    %v435 = vsub.s32 1, %v434
    %v436 = vrot.slane %v427, %v435
    %v437 = vlaneseq
    %v438 = vshrl.u32 %v437, 7
    %v439 = vsub.s32 2, %v438
    %v440 = vrot.slane %v427, %v439
    %v441 = vlaneseq
    %v442 = vshrl.u32 %v441, 7
    %v443 = vsub.s32 3, %v442
    %v444 = vrot.slane %v427, %v443
    %v451 = vcombine.high %v41, %v41
    %v453 = vunpack.c.l.s4 1983009808
    %v454 = vunpack.c.0.s8 %v453
    %v455 = vlaneseq
    %v456 = vshrl.u32 %v455, 7
    %v457 = vsub.s32 %v454, %v456
    %v458 = vrot.slane %v41, %v457
    %v460 = vunpack.c.l.s4 1983009808
    %v461 = vunpack.c.0.s8 %v460
    %v462 = vlaneseq
    %v463 = vshrl.u32 %v462, 7
    %v464 = vsub.s32 %v461, %v463
    %v465 = vrot.slane %v451, %v464
    %v466 = vcombine.high %v458, %v458
    %v467 = vcombine.high %v465, %v465
    %v469 = vunpack.c.l.s4 1983009808
    %v470 = vunpack.c.0.s8 %v469
    %v471 = vlaneseq
    %v472 = vshrl.u32 %v471, 7
    %v473 = vsub.s32 %v470, %v472
    %v474 = vrot.slane %v42, %v473
    %v475 = vcombine.high %v474, %v474
    %482 = vmatprep.subr.mxu0 %v104
    %483 = vmatpush1.msra.mxu0 %v103
    %484 = vmatprep.subr.mxu0 %v100
    %485 = vmatpush1.msra.mxu0 %v99
    %486 = vmatprep.subr.mxu0 %v96
    %487 = vmatpush1.msra.mxu0 %v95
    %488 = vmatprep.subr.mxu0 %v92
    %489 = vmatpush1.msra.mxu0 %v91
    %490 = vmatprep.subr.mxu0 %v88
    %491 = vmatpush1.msra.mxu0 %v87
    %492 = vmatprep.subr.mxu0 %v84
    %493 = vmatpush1.msra.mxu0 %v83
    %494 = vmatprep.subr.mxu0 %v80
    %495 = vmatpush1.msra.mxu0 %v79
    %496 = vmatprep.subr.mxu0 %v76
    %497 = vmatpush1.msra.mxu0 %v75
    %498 = vmatprep.subr.mxu0 %v72
    %499 = vmatpush1.msra.mxu0 %v71
    %500 = vmatprep.subr.mxu0 %v68
    %501 = vmatpush1.msra.mxu0 %v67
    %502 = vmatprep.subr.mxu0 %v64
    %503 = vmatpush1.msra.mxu0 %v63
    %504 = vmatprep.subr.mxu0 %v60
    %505 = vmatpush1.msra.mxu0 %v59
    %506 = vmatprep.subr.mxu0 %v56
    %507 = vmatpush1.msra.mxu0 %v55
    %508 = vmatprep.subr.mxu0 %v52
    %509 = vmatpush1.msra.mxu0 %v51
    %510 = vmatprep.subr.mxu0 %v48
    %511 = vmatpush1.msra.mxu0 %v47
    %512 = vmatprep.subr.mxu0 %v44
    %513 = vmatpush1.msra.mxu0 %v43
    %514 = vmatprep.subr.mxu0 %v168
    %515 = vmatpush2.msra.mxu0 %v167
    %516 = vmatprep.subr.mxu0 %v164
    %517 = vmatpush2.msra.mxu0 %v163
    %518 = vmatprep.subr.mxu0 %v160
    %519 = vmatpush2.msra.mxu0 %v159
    %520 = vmatprep.subr.mxu0 %v156
    %521 = vmatpush2.msra.mxu0 %v155
    %522 = vmatprep.subr.mxu0 %v152
    %523 = vmatpush2.msra.mxu0 %v151
    %524 = vmatprep.subr.mxu0 %v148
    %525 = vmatpush2.msra.mxu0 %v147
    %526 = vmatprep.subr.mxu0 %v144
    %527 = vmatpush2.msra.mxu0 %v143
    %528 = vmatprep.subr.mxu0 %v140
    %529 = vmatpush2.msra.mxu0 %v139
    %530 = vmatprep.subr.mxu0 %v136
    %531 = vmatpush2.msra.mxu0 %v135
    %532 = vmatprep.subr.mxu0 %v132
    %533 = vmatpush2.msra.mxu0 %v131
    %534 = vmatprep.subr.mxu0 %v128
    %535 = vmatpush2.msra.mxu0 %v127
    %536 = vmatprep.subr.mxu0 %v124
    %537 = vmatpush2.msra.mxu0 %v123
    %538 = vmatprep.subr.mxu0 %v120
    %539 = vmatpush2.msra.mxu0 %v119
    %540 = vmatprep.subr.mxu0 %v116
    %541 = vmatpush2.msra.mxu0 %v115
    %542 = vmatprep.subr.mxu0 %v112
    %543 = vmatpush2.msra.mxu0 %v111
    %544 = vmatprep.subr.mxu0 %v108
    %545 = vmatpush2.msra.mxu0 %v107
    %546 = vmatprep.mubr.f32.mxu0 %v466
    %547 = vmatmul.mubr.f32.gmra.mxu0 %v458
    %v548 = vpop.f32.mrf.mxu0
    %v549 = vadd.f32 %v432, %v548
    %v550 = vpop.f32.mrf.mxu0
    %v551 = vadd.f32 %v436, %v550
    %552 = vdwg.mxu0
    %553 = vmatprep.subr.mxu0 %v232
    %554 = vmatpush1.msra.mxu0 %v231
    %555 = vmatprep.subr.mxu0 %v228
    %556 = vmatpush1.msra.mxu0 %v227
    %557 = vmatprep.subr.mxu0 %v224
    %558 = vmatpush1.msra.mxu0 %v223
    %559 = vmatprep.subr.mxu0 %v220
    %560 = vmatpush1.msra.mxu0 %v219
    %561 = vmatprep.subr.mxu0 %v216
    %562 = vmatpush1.msra.mxu0 %v215
    %563 = vmatprep.subr.mxu0 %v212
    %564 = vmatpush1.msra.mxu0 %v211
    %565 = vmatprep.subr.mxu0 %v208
    %566 = vmatpush1.msra.mxu0 %v207
    %567 = vmatprep.subr.mxu0 %v204
    %568 = vmatpush1.msra.mxu0 %v203
    %569 = vmatprep.subr.mxu0 %v200
    %570 = vmatpush1.msra.mxu0 %v199
    %571 = vmatprep.subr.mxu0 %v196
    %572 = vmatpush1.msra.mxu0 %v195
    %573 = vmatprep.subr.mxu0 %v192
    %574 = vmatpush1.msra.mxu0 %v191
    %575 = vmatprep.subr.mxu0 %v188
    %576 = vmatpush1.msra.mxu0 %v187
    %577 = vmatprep.subr.mxu0 %v184
    %578 = vmatpush1.msra.mxu0 %v183
    %579 = vmatprep.subr.mxu0 %v180
    %580 = vmatpush1.msra.mxu0 %v179
    %581 = vmatprep.subr.mxu0 %v176
    %582 = vmatpush1.msra.mxu0 %v175
    %583 = vmatprep.subr.mxu0 %v172
    %584 = vmatpush1.msra.mxu0 %v171
    %585 = vmatprep.subr.mxu0 %v296
    %586 = vmatpush2.msra.mxu0 %v295
    %587 = vmatprep.subr.mxu0 %v292
    %588 = vmatpush2.msra.mxu0 %v291
    %589 = vmatprep.subr.mxu0 %v288
    %590 = vmatpush2.msra.mxu0 %v287
    %591 = vmatprep.subr.mxu0 %v284
    %592 = vmatpush2.msra.mxu0 %v283
    %593 = vmatprep.subr.mxu0 %v280
    %594 = vmatpush2.msra.mxu0 %v279
    %595 = vmatprep.subr.mxu0 %v276
    %596 = vmatpush2.msra.mxu0 %v275
    %597 = vmatprep.subr.mxu0 %v272
    %598 = vmatpush2.msra.mxu0 %v271
    %599 = vmatprep.subr.mxu0 %v268
    %600 = vmatpush2.msra.mxu0 %v267
    %601 = vmatprep.subr.mxu0 %v264
    %602 = vmatpush2.msra.mxu0 %v263
    %603 = vmatprep.subr.mxu0 %v260
    %604 = vmatpush2.msra.mxu0 %v259
    %605 = vmatprep.subr.mxu0 %v256
    %606 = vmatpush2.msra.mxu0 %v255
    %607 = vmatprep.subr.mxu0 %v252
    %608 = vmatpush2.msra.mxu0 %v251
    %609 = vmatprep.subr.mxu0 %v248
    %610 = vmatpush2.msra.mxu0 %v247
    %611 = vmatprep.subr.mxu0 %v244
    %612 = vmatpush2.msra.mxu0 %v243
    %613 = vmatprep.subr.mxu0 %v240
    %614 = vmatpush2.msra.mxu0 %v239
    %615 = vmatprep.subr.mxu0 %v236
    %616 = vmatpush2.msra.mxu0 %v235
    %617 = vmatprep.mubr.f32.mxu0 %v467
    %618 = vmatmul.mubr.f32.gmra.mxu0 %v465
    %v619 = vpop.f32.mrf.mxu0
    %v620 = vadd.f32 %v549, %v619
    %v621 = vpop.f32.mrf.mxu0
    %v622 = vadd.f32 %v551, %v621
    %623 = vdwg.mxu0
    %624 = vmatprep.subr.mxu0 %v360
    %625 = vmatpush1.msra.mxu0 %v359
    %626 = vmatprep.subr.mxu0 %v356
    %627 = vmatpush1.msra.mxu0 %v355
    %628 = vmatprep.subr.mxu0 %v352
    %629 = vmatpush1.msra.mxu0 %v351
    %630 = vmatprep.subr.mxu0 %v348
    %631 = vmatpush1.msra.mxu0 %v347
    %632 = vmatprep.subr.mxu0 %v344
    %633 = vmatpush1.msra.mxu0 %v343
    %634 = vmatprep.subr.mxu0 %v340
    %635 = vmatpush1.msra.mxu0 %v339
    %636 = vmatprep.subr.mxu0 %v336
    %637 = vmatpush1.msra.mxu0 %v335
    %638 = vmatprep.subr.mxu0 %v332
    %639 = vmatpush1.msra.mxu0 %v331
    %640 = vmatprep.subr.mxu0 %v328
    %641 = vmatpush1.msra.mxu0 %v327
    %642 = vmatprep.subr.mxu0 %v324
    %643 = vmatpush1.msra.mxu0 %v323
    %644 = vmatprep.subr.mxu0 %v320
    %645 = vmatpush1.msra.mxu0 %v319
    %646 = vmatprep.subr.mxu0 %v316
    %647 = vmatpush1.msra.mxu0 %v315
    %648 = vmatprep.subr.mxu0 %v312
    %649 = vmatpush1.msra.mxu0 %v311
    %650 = vmatprep.subr.mxu0 %v308
    %651 = vmatpush1.msra.mxu0 %v307
    %652 = vmatprep.subr.mxu0 %v304
    %653 = vmatpush1.msra.mxu0 %v303
    %654 = vmatprep.subr.mxu0 %v300
    %655 = vmatpush1.msra.mxu0 %v299
    %656 = vmatprep.subr.mxu0 %v424
    %657 = vmatpush2.msra.mxu0 %v423
    %658 = vmatprep.subr.mxu0 %v420
    %659 = vmatpush2.msra.mxu0 %v419
    %660 = vmatprep.subr.mxu0 %v416
    %661 = vmatpush2.msra.mxu0 %v415
    %662 = vmatprep.subr.mxu0 %v412
    %663 = vmatpush2.msra.mxu0 %v411
    %664 = vmatprep.subr.mxu0 %v408
    %665 = vmatpush2.msra.mxu0 %v407
    %666 = vmatprep.subr.mxu0 %v404
    %667 = vmatpush2.msra.mxu0 %v403
    %668 = vmatprep.subr.mxu0 %v400
    %669 = vmatpush2.msra.mxu0 %v399
    %670 = vmatprep.subr.mxu0 %v396
    %671 = vmatpush2.msra.mxu0 %v395
    %672 = vmatprep.subr.mxu0 %v392
    %673 = vmatpush2.msra.mxu0 %v391
    %674 = vmatprep.subr.mxu0 %v388
    %675 = vmatpush2.msra.mxu0 %v387
    %676 = vmatprep.subr.mxu0 %v384
    %677 = vmatpush2.msra.mxu0 %v383
    %678 = vmatprep.subr.mxu0 %v380
    %679 = vmatpush2.msra.mxu0 %v379
    %680 = vmatprep.subr.mxu0 %v376
    %681 = vmatpush2.msra.mxu0 %v375
    %682 = vmatprep.subr.mxu0 %v372
    %683 = vmatpush2.msra.mxu0 %v371
    %684 = vmatprep.subr.mxu0 %v368
    %685 = vmatpush2.msra.mxu0 %v367
    %686 = vmatprep.subr.mxu0 %v364
    %687 = vmatpush2.msra.mxu0 %v363
    %688 = vmatprep.mubr.f32.mxu0 %v475
    %689 = vmatmul.mubr.f32.gmra.mxu0 %v474
    %v690 = vpop.f32.mrf.mxu0
    %v691 = vadd.f32 %v620, %v690
    %v692 = vpop.f32.mrf.mxu0
    %v693 = vadd.f32 %v622, %v692
    %694 = vdwg.mxu0
    %695 = vmatprep.subr.mxu0 %v106
    %696 = vmatpush1.msra.mxu0 %v105
    %697 = vmatprep.subr.mxu0 %v102
    %698 = vmatpush1.msra.mxu0 %v101
    %699 = vmatprep.subr.mxu0 %v98
    %700 = vmatpush1.msra.mxu0 %v97
    %701 = vmatprep.subr.mxu0 %v94
    %702 = vmatpush1.msra.mxu0 %v93
    %703 = vmatprep.subr.mxu0 %v90
    %704 = vmatpush1.msra.mxu0 %v89
    %705 = vmatprep.subr.mxu0 %v86
    %706 = vmatpush1.msra.mxu0 %v85
    %707 = vmatprep.subr.mxu0 %v82
    %708 = vmatpush1.msra.mxu0 %v81
    %709 = vmatprep.subr.mxu0 %v78
    %710 = vmatpush1.msra.mxu0 %v77
    %711 = vmatprep.subr.mxu0 %v74
    %712 = vmatpush1.msra.mxu0 %v73
    %713 = vmatprep.subr.mxu0 %v70
    %714 = vmatpush1.msra.mxu0 %v69
    %715 = vmatprep.subr.mxu0 %v66
    %716 = vmatpush1.msra.mxu0 %v65
    %717 = vmatprep.subr.mxu0 %v62
    %718 = vmatpush1.msra.mxu0 %v61
    %719 = vmatprep.subr.mxu0 %v58
    %720 = vmatpush1.msra.mxu0 %v57
    %721 = vmatprep.subr.mxu0 %v54
    %722 = vmatpush1.msra.mxu0 %v53
    %723 = vmatprep.subr.mxu0 %v50
    %724 = vmatpush1.msra.mxu0 %v49
    %725 = vmatprep.subr.mxu0 %v46
    %726 = vmatpush1.msra.mxu0 %v45
    %727 = vmatprep.subr.mxu0 %v170
    %728 = vmatpush2.msra.mxu0 %v169
    %729 = vmatprep.subr.mxu0 %v166
    %730 = vmatpush2.msra.mxu0 %v165
    %731 = vmatprep.subr.mxu0 %v162
    %732 = vmatpush2.msra.mxu0 %v161
    %733 = vmatprep.subr.mxu0 %v158
    %734 = vmatpush2.msra.mxu0 %v157
    %735 = vmatprep.subr.mxu0 %v154
    %736 = vmatpush2.msra.mxu0 %v153
    %737 = vmatprep.subr.mxu0 %v150
    %738 = vmatpush2.msra.mxu0 %v149
    %739 = vmatprep.subr.mxu0 %v146
    %740 = vmatpush2.msra.mxu0 %v145
    %741 = vmatprep.subr.mxu0 %v142
    %742 = vmatpush2.msra.mxu0 %v141
    %743 = vmatprep.subr.mxu0 %v138
    %744 = vmatpush2.msra.mxu0 %v137
    %745 = vmatprep.subr.mxu0 %v134
    %746 = vmatpush2.msra.mxu0 %v133
    %747 = vmatprep.subr.mxu0 %v130
    %748 = vmatpush2.msra.mxu0 %v129
    %749 = vmatprep.subr.mxu0 %v126
    %750 = vmatpush2.msra.mxu0 %v125
    %751 = vmatprep.subr.mxu0 %v122
    %752 = vmatpush2.msra.mxu0 %v121
    %753 = vmatprep.subr.mxu0 %v118
    %754 = vmatpush2.msra.mxu0 %v117
    %755 = vmatprep.subr.mxu0 %v114
    %756 = vmatpush2.msra.mxu0 %v113
    %757 = vmatprep.subr.mxu0 %v110
    %758 = vmatpush2.msra.mxu0 %v109
    %759 = vmatprep.mubr.f32.mxu0 %v466
    %760 = vmatmul.mubr.f32.gmra.mxu0 %v458
    %v761 = vpop.f32.mrf.mxu0
    %v762 = vadd.f32 %v440, %v761
    %v763 = vpop.f32.mrf.mxu0
    %v764 = vadd.f32 %v444, %v763
    %765 = vdwg.mxu0
    %766 = vmatprep.subr.mxu0 %v234
    %767 = vmatpush1.msra.mxu0 %v233
    %768 = vmatprep.subr.mxu0 %v230
    %769 = vmatpush1.msra.mxu0 %v229
    %770 = vmatprep.subr.mxu0 %v226
    %771 = vmatpush1.msra.mxu0 %v225
    %772 = vmatprep.subr.mxu0 %v222
    %773 = vmatpush1.msra.mxu0 %v221
    %774 = vmatprep.subr.mxu0 %v218
    %775 = vmatpush1.msra.mxu0 %v217
    %776 = vmatprep.subr.mxu0 %v214
    %777 = vmatpush1.msra.mxu0 %v213
    %778 = vmatprep.subr.mxu0 %v210
    %779 = vmatpush1.msra.mxu0 %v209
    %780 = vmatprep.subr.mxu0 %v206
    %781 = vmatpush1.msra.mxu0 %v205
    %782 = vmatprep.subr.mxu0 %v202
    %783 = vmatpush1.msra.mxu0 %v201
    %784 = vmatprep.subr.mxu0 %v198
    %785 = vmatpush1.msra.mxu0 %v197
    %786 = vmatprep.subr.mxu0 %v194
    %787 = vmatpush1.msra.mxu0 %v193
    %788 = vmatprep.subr.mxu0 %v190
    %789 = vmatpush1.msra.mxu0 %v189
    %790 = vmatprep.subr.mxu0 %v186
    %791 = vmatpush1.msra.mxu0 %v185
    %792 = vmatprep.subr.mxu0 %v182
    %793 = vmatpush1.msra.mxu0 %v181
    %794 = vmatprep.subr.mxu0 %v178
    %795 = vmatpush1.msra.mxu0 %v177
    %796 = vmatprep.subr.mxu0 %v174
    %797 = vmatpush1.msra.mxu0 %v173
    %798 = vmatprep.subr.mxu0 %v298
    %799 = vmatpush2.msra.mxu0 %v297
    %800 = vmatprep.subr.mxu0 %v294
    %801 = vmatpush2.msra.mxu0 %v293
    %802 = vmatprep.subr.mxu0 %v290
    %803 = vmatpush2.msra.mxu0 %v289
    %804 = vmatprep.subr.mxu0 %v286
    %805 = vmatpush2.msra.mxu0 %v285
    %806 = vmatprep.subr.mxu0 %v282
    %807 = vmatpush2.msra.mxu0 %v281
    %808 = vmatprep.subr.mxu0 %v278
    %809 = vmatpush2.msra.mxu0 %v277
    %810 = vmatprep.subr.mxu0 %v274
    %811 = vmatpush2.msra.mxu0 %v273
    %812 = vmatprep.subr.mxu0 %v270
    %813 = vmatpush2.msra.mxu0 %v269
    %814 = vmatprep.subr.mxu0 %v266
    %815 = vmatpush2.msra.mxu0 %v265
    %816 = vmatprep.subr.mxu0 %v262
    %817 = vmatpush2.msra.mxu0 %v261
    %818 = vmatprep.subr.mxu0 %v258
    %819 = vmatpush2.msra.mxu0 %v257
    %820 = vmatprep.subr.mxu0 %v254
    %821 = vmatpush2.msra.mxu0 %v253
    %822 = vmatprep.subr.mxu0 %v250
    %823 = vmatpush2.msra.mxu0 %v249
    %824 = vmatprep.subr.mxu0 %v246
    %825 = vmatpush2.msra.mxu0 %v245
    %826 = vmatprep.subr.mxu0 %v242
    %827 = vmatpush2.msra.mxu0 %v241
    %828 = vmatprep.subr.mxu0 %v238
    %829 = vmatpush2.msra.mxu0 %v237
    %830 = vmatprep.mubr.f32.mxu0 %v467
    %831 = vmatmul.mubr.f32.gmra.mxu0 %v465
    %v832 = vpop.f32.mrf.mxu0
    %v833 = vadd.f32 %v762, %v832
    %v834 = vpop.f32.mrf.mxu0
    %v835 = vadd.f32 %v764, %v834
    %836 = vdwg.mxu0
    %837 = vmatprep.subr.mxu0 %v362
    %838 = vmatpush1.msra.mxu0 %v361
    %839 = vmatprep.subr.mxu0 %v358
    %840 = vmatpush1.msra.mxu0 %v357
    %841 = vmatprep.subr.mxu0 %v354
    %842 = vmatpush1.msra.mxu0 %v353
    %843 = vmatprep.subr.mxu0 %v350
    %844 = vmatpush1.msra.mxu0 %v349
    %845 = vmatprep.subr.mxu0 %v346
    %846 = vmatpush1.msra.mxu0 %v345
    %847 = vmatprep.subr.mxu0 %v342
    %848 = vmatpush1.msra.mxu0 %v341
    %849 = vmatprep.subr.mxu0 %v338
    %850 = vmatpush1.msra.mxu0 %v337
    %851 = vmatprep.subr.mxu0 %v334
    %852 = vmatpush1.msra.mxu0 %v333
    %853 = vmatprep.subr.mxu0 %v330
    %854 = vmatpush1.msra.mxu0 %v329
    %855 = vmatprep.subr.mxu0 %v326
    %856 = vmatpush1.msra.mxu0 %v325
    %857 = vmatprep.subr.mxu0 %v322
    %858 = vmatpush1.msra.mxu0 %v321
    %859 = vmatprep.subr.mxu0 %v318
    %860 = vmatpush1.msra.mxu0 %v317
    %861 = vmatprep.subr.mxu0 %v314
    %862 = vmatpush1.msra.mxu0 %v313
    %863 = vmatprep.subr.mxu0 %v310
    %864 = vmatpush1.msra.mxu0 %v309
    %865 = vmatprep.subr.mxu0 %v306
    %866 = vmatpush1.msra.mxu0 %v305
    %867 = vmatprep.subr.mxu0 %v302
    %868 = vmatpush1.msra.mxu0 %v301
    %869 = vmatprep.subr.mxu0 %v426
    %870 = vmatpush2.msra.mxu0 %v425
    %871 = vmatprep.subr.mxu0 %v422
    %872 = vmatpush2.msra.mxu0 %v421
    %873 = vmatprep.subr.mxu0 %v418
    %874 = vmatpush2.msra.mxu0 %v417
    %875 = vmatprep.subr.mxu0 %v414
    %876 = vmatpush2.msra.mxu0 %v413
    %877 = vmatprep.subr.mxu0 %v410
    %878 = vmatpush2.msra.mxu0 %v409
    %879 = vmatprep.subr.mxu0 %v406
    %880 = vmatpush2.msra.mxu0 %v405
    %881 = vmatprep.subr.mxu0 %v402
    %882 = vmatpush2.msra.mxu0 %v401
    %883 = vmatprep.subr.mxu0 %v398
    %884 = vmatpush2.msra.mxu0 %v397
    %885 = vmatprep.subr.mxu0 %v394
    %886 = vmatpush2.msra.mxu0 %v393
    %887 = vmatprep.subr.mxu0 %v390
    %888 = vmatpush2.msra.mxu0 %v389
    %889 = vmatprep.subr.mxu0 %v386
    %890 = vmatpush2.msra.mxu0 %v385
    %891 = vmatprep.subr.mxu0 %v382
    %892 = vmatpush2.msra.mxu0 %v381
    %893 = vmatprep.subr.mxu0 %v378
    %894 = vmatpush2.msra.mxu0 %v377
    %895 = vmatprep.subr.mxu0 %v374
    %896 = vmatpush2.msra.mxu0 %v373
    %897 = vmatprep.subr.mxu0 %v370
    %898 = vmatpush2.msra.mxu0 %v369
    %899 = vmatprep.subr.mxu0 %v366
    %900 = vmatpush2.msra.mxu0 %v365
    %901 = vmatprep.mubr.f32.mxu0 %v475
    %902 = vmatmul.mubr.f32.gmra.mxu0 %v474
    %v903 = vpop.f32.mrf.mxu0
    %v904 = vadd.f32 %v833, %v903
    %v905 = vpop.f32.mrf.mxu0
    %v906 = vadd.f32 %v835, %v905
    %907 = vdwg.mxu0
    %v912 = vcombine.low %v691, %v693
    %v913 = vcombine.low %v904, %v906
    %v915 = vunpack.c.l.s4 1983009808
    %v916 = vunpack.c.0.s8 %v915
    %v917 = vlaneseq
    %v918 = vshrl.u32 %v917, 7
    %v919 = vsub.s32 %v916, %v918
    %v920 = vrot.slane %v912, %v919
    %v922 = vunpack.c.l.s4 1983009808
    %v923 = vunpack.c.0.s8 %v922
    %v924 = vlaneseq
    %v925 = vshrl.u32 %v924, 7
    %v926 = vsub.s32 %v923, %v925
    %v927 = vrot.slane %v913, %v926
    %v928 = vcombine.low %v920, %v927
    %930 = vst [vmem:[#allocation7] sm:$0xff] %v928
    // Predicated region
    $region22: #{language_encoder_head.1} parent=1 // pred_check
      _
    $region23: #{language_encoder_head.1} parent=1 // pred_check_branch
      %932 = sbr.rel (0) target = $region25
    $region24: #{language_encoder_head.1} parent=1 // pred_region
      %s934 = ssub.s32 128, 128
      %935 = vsyncadd [#allocation4], %s934
      %s937 = sshll.u32 [#allocation7], 4
      %s938 = int_to_ptr.vmem [resolvable:$true] %s937
      %940 = dma.vmem_to_hbm [thread:$0]  %s938, 128, %s3, [#allocation4]
    $region25: #{language_encoder_head.1} parent=1 // pred_fallthru
      _
    // Predicated region
    $region26: #{language_encoder_head.1} parent=1 // pred_check
      _
    $region27: #{language_encoder_head.1} parent=1 // pred_check_branch
      %942 = sbr.rel (0) target = $region29
    $region28: #{language_encoder_head.1} parent=1 // pred_region
      %943 = dma.done [#allocation4], 128
    $region29: #{language_encoder_head.1} parent=1 // pred_fallthru
      _
    %944 = vsyncpa [#allocation3], 1
    %945 = vsyncpa [#allocation6], 1
    %946 = vsyncpa [#allocation4], 1

</llo_original>
